<compile_context>
chip_gen: v5e
topology: v5e:2x2
jax: 0.10.0
libtpu: 0.0.40
codegen_flags: <defaults>
</compile_context>

<pallas_src>
import jax
import jax.numpy as jnp
import numpy as np
from jax import lax
from jax.experimental import pallas as pl
from jax.experimental.pallas import tpu as pltpu

# Static problem sizes (match nn.Conv2d(3, 3, 2, bias=False) + max_pool2d(3)).
C_IN = 3
C_OUT = 3
KH = KW = 2
H_IN = W_IN = 10          # x2 spatial
H_CONV = W_CONV = 9       # conv output spatial (= x1 spatial)
POOL = 3
H_OUT = W_OUT = 3         # pooled output spatial

LANES = 128               # one vreg row
SUBLANES = 8


def conv_add_pool_kernel(w_ref, x1_ref, x2_ref, out_ref):
    """Fused Conv2d(3,3,2,bias=False) + add + max_pool2d(3) on flat planes.

    w_ref:   SMEM (36,) f32   flattened [co, ci, kh, kw] conv weight.
    x1_ref:  VMEM (C_OUT, NP, 128) f32  x1, W padded 9->10, 10-pitch flat rows.
    x2_ref:  VMEM (C_IN,  NP, 128) f32  x2, 10-pitch flat rows.
    out_ref: VMEM (C_OUT, NP, 128) f32  pooled value of window (ph, pw) lands
             at lane (3*ph)*10 + 3*pw; the wrapper gathers those lanes.
    Every per-channel plane is exactly one native (8, 128) f32 vreg, so every
    roll / FMA / store below is an unmasked whole-vreg op.
    """

    def back(x, d):
        # back(x, d)[.., i] == x[.., (i + d) % 128]  (pltpu.roll == jnp.roll
        # semantics; shift = 128 - d keeps the static amount non-negative).
        # Wrapped tail lanes are never consumed downstream.
        return pltpu.roll(x, shift=LANES - d, axis=1)

    # Hoist all 36 scalar weight loads (sld + splat) out of the FMA stream.
    w = [[[[w_ref[((co * C_IN + ci) * KH + kh) * KW + kw]
            for kw in range(KW)]
           for kh in range(KH)]
          for ci in range(C_IN)]
         for co in range(C_OUT)]

    # One XLU lane-roll per (ci, kh, kw) tap, reused by all output channels.
    # Lane p = h*10 + w of shifted[ci][kh*KW + kw] holds x2[ci, h+kh, w+kw].
    shifted = []
    for ci in range(C_IN):
        plane = x2_ref[ci]
        per_tap = []
        for kh in range(KH):
            for kw in range(KW):
                d = kh * W_IN + kw
                per_tap.append(plane if d == 0 else back(plane, d))
        shifted.append(per_tap)

    def pool_lanes(z, step):
        # max over lanes {p, p+step, p+2*step}, evaluated at every lane p.
        return jnp.maximum(jnp.maximum(z, back(z, step)), back(z, 2 * step))

    for co in range(C_OUT):
        # x1 + Conv2d: 12 whole-vreg multiply-adds per output channel.
        acc = x1_ref[co]
        for ci in range(C_IN):
            for kh in range(KH):
                for kw in range(KW):
                    acc = acc + shifted[ci][kh * KW + kw] * w[co][ci][kh][kw]
        # 3x3 / stride-3 max pool: lane shifts 1,2 cover a window's columns,
        # lane shifts 10,20 cover its rows (row pitch is 10).  Single unmasked
        # whole-vreg store per channel.
        out_ref[co] = pool_lanes(pool_lanes(acc, 1), W_IN)


def _cost_estimate(n):
    conv_flops = 2 * n * C_OUT * C_IN * H_CONV * W_CONV * KH * KW
    add_flops = n * C_OUT * H_CONV * W_CONV
    pool_flops = 8 * n * C_OUT * H_OUT * W_OUT
    bytes_accessed = 4 * (n * C_OUT * H_CONV * W_CONV        # x1
                          + n * C_IN * H_IN * W_IN            # x2
                          + C_OUT * C_IN * KH * KW            # weight
                          + n * C_OUT * H_OUT * W_OUT)        # out
    return pl.CostEstimate(flops=conv_flops + add_flops + pool_flops,
                           transcendentals=0,
                           bytes_accessed=bytes_accessed)


@jax.jit
def model_forward(x1, x2, weight):
    n = x1.shape[0]
    n_pad = ((n + SUBLANES - 1) // SUBLANES) * SUBLANES

    # ---- lane-/sublane-dense layout plumbing (plain XLA, outside the kernel) ----
    # x2: (N, 3, 10, 10) -> channel-major flat 10-pitch planes -> (3, NP, 128).
    x2f = jnp.transpose(x2.astype(jnp.float32), (1, 0, 2, 3))
    x2f = x2f.reshape(C_IN, n, H_IN * W_IN)
    x2f = jnp.pad(x2f, ((0, 0), (0, n_pad - n), (0, LANES - H_IN * W_IN)))

    # x1: (N, 3, 9, 9) -> pad W 9->10 so it shares x2's row pitch -> (3, NP, 128).
    x1f = jnp.pad(x1.astype(jnp.float32),
                  ((0, 0), (0, 0), (0, 0), (0, W_IN - W_CONV)))
    x1f = jnp.transpose(x1f, (1, 0, 2, 3)).reshape(C_OUT, n, H_CONV * W_IN)
    x1f = jnp.pad(x1f, ((0, 0), (0, n_pad - n), (0, LANES - H_CONV * W_IN)))

    w_flat = weight.reshape(-1).astype(jnp.float32)

    # Single grid point: total live data is KiB-scale, far under VMEM on any
    # generation.  For large N, add grid=(N // n_tile,) over batch with
    # dimension_semantics=("parallel",) to use both v7x TensorCores.
    out_flat = pl.pallas_call(
        conv_add_pool_kernel,
        out_shape=jax.ShapeDtypeStruct((C_OUT, n_pad, LANES), jnp.float32),
        in_specs=[
            pl.BlockSpec(memory_space=pltpu.MemorySpace.SMEM),   # weights
            pl.BlockSpec(memory_space=pltpu.MemorySpace.VMEM),   # x1
            pl.BlockSpec(memory_space=pltpu.MemorySpace.VMEM),   # x2
        ],
        out_specs=pl.BlockSpec(memory_space=pltpu.MemorySpace.VMEM),
        cost_estimate=_cost_estimate(n),
    )(w_flat, x1f, x2f)

    # Gather the 9 pooled lanes per plane and restore NCHW (layout plumbing).
    pooled = out_flat[:, :n, :H_CONV * W_IN].reshape(C_OUT, n, H_CONV, W_IN)
    pooled = pooled[:, :, ::POOL, 0:W_CONV:POOL]          # (3, N, 3, 3)
    return jnp.transpose(pooled, (1, 0, 2, 3))            # (N, 3, 3, 3)


def reference_forward(x1, x2, weight):
    """Pure-JAX reference (mirrors the PyTorch forward)."""
    conv = lax.conv_general_dilated(
        x2, weight, window_strides=(1, 1), padding="VALID",
        dimension_numbers=("NCHW", "OIHW", "NCHW"))
    z = x1 + conv
    return lax.reduce_window(
        z, -jnp.inf, lax.max,
        window_dimensions=(1, 1, POOL, POOL),
        window_strides=(1, 1, POOL, POOL),
        padding="VALID")


if __name__ == "__main__":
    key = jax.random.PRNGKey(0)
    k1, k2, kw = jax.random.split(key, 3)

    N = 4
    # x1 uses the only shape for which the PyTorch forward is valid (9x9),
    # not the original harness's inconsistent (4,3,8,8).
    x1 = jax.random.normal(k1, (N, C_IN, H_CONV, W_CONV), jnp.float32)
    x2 = jax.random.normal(k2, (N, C_IN, H_IN, W_IN), jnp.float32)
    # Deterministic "Conv2d(3, 3, 2, bias=False)" weight, shape (3, 3, 2, 2).
    weight = jax.random.normal(kw, (C_OUT, C_IN, KH, KW), jnp.float32) * 0.2

    out = jax.block_until_ready(model_forward(x1, x2, weight))

    ref = reference_forward(x1, x2, weight)
    np.testing.assert_allclose(np.asarray(out), np.asarray(ref),
                               rtol=1e-5, atol=1e-5)
    print("KERNEL_OK")
</pallas_src>

<mosaic_0001>
module attributes {stable_mosaic.version = 11 : i64} {
  func.func @conv_add_pool_kernel(%arg0: memref<36xf32, #tpu.memory_space<smem>>, %arg1: memref<3x8x128xf32, #tpu.memory_space<vmem>>, %arg2: memref<3x8x128xf32, #tpu.memory_space<vmem>>, %arg3: memref<3x8x128xf32, #tpu.memory_space<vmem>>) attributes {dimension_semantics = [], scalar_prefetch = 0 : i64, scratch_operands = 0 : i64, tpu.core_type = #tpu.core_type<tc>} {
    %c0 = arith.constant 0 : index
    %0 = memref.load %arg0[%c0] : memref<36xf32, #tpu.memory_space<smem>>
    %c1 = arith.constant 1 : index
    %1 = memref.load %arg0[%c1] : memref<36xf32, #tpu.memory_space<smem>>
    %c2 = arith.constant 2 : index
    %2 = memref.load %arg0[%c2] : memref<36xf32, #tpu.memory_space<smem>>
    %c3 = arith.constant 3 : index
    %3 = memref.load %arg0[%c3] : memref<36xf32, #tpu.memory_space<smem>>
    %c4 = arith.constant 4 : index
    %4 = memref.load %arg0[%c4] : memref<36xf32, #tpu.memory_space<smem>>
    %c5 = arith.constant 5 : index
    %5 = memref.load %arg0[%c5] : memref<36xf32, #tpu.memory_space<smem>>
    %c6 = arith.constant 6 : index
    %6 = memref.load %arg0[%c6] : memref<36xf32, #tpu.memory_space<smem>>
    %c7 = arith.constant 7 : index
    %7 = memref.load %arg0[%c7] : memref<36xf32, #tpu.memory_space<smem>>
    %c8 = arith.constant 8 : index
    %8 = memref.load %arg0[%c8] : memref<36xf32, #tpu.memory_space<smem>>
    %c9 = arith.constant 9 : index
    %9 = memref.load %arg0[%c9] : memref<36xf32, #tpu.memory_space<smem>>
    %c10 = arith.constant 10 : index
    %10 = memref.load %arg0[%c10] : memref<36xf32, #tpu.memory_space<smem>>
    %c11 = arith.constant 11 : index
    %11 = memref.load %arg0[%c11] : memref<36xf32, #tpu.memory_space<smem>>
    %c12 = arith.constant 12 : index
    %12 = memref.load %arg0[%c12] : memref<36xf32, #tpu.memory_space<smem>>
    %c13 = arith.constant 13 : index
    %13 = memref.load %arg0[%c13] : memref<36xf32, #tpu.memory_space<smem>>
    %c14 = arith.constant 14 : index
    %14 = memref.load %arg0[%c14] : memref<36xf32, #tpu.memory_space<smem>>
    %c15 = arith.constant 15 : index
    %15 = memref.load %arg0[%c15] : memref<36xf32, #tpu.memory_space<smem>>
    %c16 = arith.constant 16 : index
    %16 = memref.load %arg0[%c16] : memref<36xf32, #tpu.memory_space<smem>>
    %c17 = arith.constant 17 : index
    %17 = memref.load %arg0[%c17] : memref<36xf32, #tpu.memory_space<smem>>
    %c18 = arith.constant 18 : index
    %18 = memref.load %arg0[%c18] : memref<36xf32, #tpu.memory_space<smem>>
    %c19 = arith.constant 19 : index
    %19 = memref.load %arg0[%c19] : memref<36xf32, #tpu.memory_space<smem>>
    %c20 = arith.constant 20 : index
    %20 = memref.load %arg0[%c20] : memref<36xf32, #tpu.memory_space<smem>>
    %c21 = arith.constant 21 : index
    %21 = memref.load %arg0[%c21] : memref<36xf32, #tpu.memory_space<smem>>
    %c22 = arith.constant 22 : index
    %22 = memref.load %arg0[%c22] : memref<36xf32, #tpu.memory_space<smem>>
    %c23 = arith.constant 23 : index
    %23 = memref.load %arg0[%c23] : memref<36xf32, #tpu.memory_space<smem>>
    %c24 = arith.constant 24 : index
    %24 = memref.load %arg0[%c24] : memref<36xf32, #tpu.memory_space<smem>>
    %c25 = arith.constant 25 : index
    %25 = memref.load %arg0[%c25] : memref<36xf32, #tpu.memory_space<smem>>
    %c26 = arith.constant 26 : index
    %26 = memref.load %arg0[%c26] : memref<36xf32, #tpu.memory_space<smem>>
    %c27 = arith.constant 27 : index
    %27 = memref.load %arg0[%c27] : memref<36xf32, #tpu.memory_space<smem>>
    %c28 = arith.constant 28 : index
    %28 = memref.load %arg0[%c28] : memref<36xf32, #tpu.memory_space<smem>>
    %c29 = arith.constant 29 : index
    %29 = memref.load %arg0[%c29] : memref<36xf32, #tpu.memory_space<smem>>
    %c30 = arith.constant 30 : index
    %30 = memref.load %arg0[%c30] : memref<36xf32, #tpu.memory_space<smem>>
    %c31 = arith.constant 31 : index
    %31 = memref.load %arg0[%c31] : memref<36xf32, #tpu.memory_space<smem>>
    %c32 = arith.constant 32 : index
    %32 = memref.load %arg0[%c32] : memref<36xf32, #tpu.memory_space<smem>>
    %c33 = arith.constant 33 : index
    %33 = memref.load %arg0[%c33] : memref<36xf32, #tpu.memory_space<smem>>
    %c34 = arith.constant 34 : index
    %34 = memref.load %arg0[%c34] : memref<36xf32, #tpu.memory_space<smem>>
    %c35 = arith.constant 35 : index
    %35 = memref.load %arg0[%c35] : memref<36xf32, #tpu.memory_space<smem>>
    %c0_0 = arith.constant 0 : index
    %c0_1 = arith.constant 0 : index
    %c0_2 = arith.constant 0 : index
    %36 = vector.load %arg2[%c0_0, %c0_1, %c0_2] : memref<3x8x128xf32, #tpu.memory_space<vmem>>, vector<1x8x128xf32>
    %37 = vector.shape_cast %36 : vector<1x8x128xf32> to vector<8x128xf32>
    %c127_i32 = arith.constant 127 : i32
    %38 = tpu.dynamic_rotate %37 by %c127_i32 dim 1 : vector<8x128xf32>, i32 -> vector<8x128xf32>
    %c118_i32 = arith.constant 118 : i32
    %39 = tpu.dynamic_rotate %37 by %c118_i32 dim 1 : vector<8x128xf32>, i32 -> vector<8x128xf32>
    %c117_i32 = arith.constant 117 : i32
    %40 = tpu.dynamic_rotate %37 by %c117_i32 dim 1 : vector<8x128xf32>, i32 -> vector<8x128xf32>
    %c1_3 = arith.constant 1 : index
    %c0_4 = arith.constant 0 : index
    %c0_5 = arith.constant 0 : index
    %41 = vector.load %arg2[%c1_3, %c0_4, %c0_5] : memref<3x8x128xf32, #tpu.memory_space<vmem>>, vector<1x8x128xf32>
    %42 = vector.shape_cast %41 : vector<1x8x128xf32> to vector<8x128xf32>
    %c127_i32_6 = arith.constant 127 : i32
    %43 = tpu.dynamic_rotate %42 by %c127_i32_6 dim 1 : vector<8x128xf32>, i32 -> vector<8x128xf32>
    %c118_i32_7 = arith.constant 118 : i32
    %44 = tpu.dynamic_rotate %42 by %c118_i32_7 dim 1 : vector<8x128xf32>, i32 -> vector<8x128xf32>
    %c117_i32_8 = arith.constant 117 : i32
    %45 = tpu.dynamic_rotate %42 by %c117_i32_8 dim 1 : vector<8x128xf32>, i32 -> vector<8x128xf32>
    %c2_9 = arith.constant 2 : index
    %c0_10 = arith.constant 0 : index
    %c0_11 = arith.constant 0 : index
    %46 = vector.load %arg2[%c2_9, %c0_10, %c0_11] : memref<3x8x128xf32, #tpu.memory_space<vmem>>, vector<1x8x128xf32>
    %47 = vector.shape_cast %46 : vector<1x8x128xf32> to vector<8x128xf32>
    %c127_i32_12 = arith.constant 127 : i32
    %48 = tpu.dynamic_rotate %47 by %c127_i32_12 dim 1 : vector<8x128xf32>, i32 -> vector<8x128xf32>
    %c118_i32_13 = arith.constant 118 : i32
    %49 = tpu.dynamic_rotate %47 by %c118_i32_13 dim 1 : vector<8x128xf32>, i32 -> vector<8x128xf32>
    %c117_i32_14 = arith.constant 117 : i32
    %50 = tpu.dynamic_rotate %47 by %c117_i32_14 dim 1 : vector<8x128xf32>, i32 -> vector<8x128xf32>
    %c0_15 = arith.constant 0 : index
    %c0_16 = arith.constant 0 : index
    %c0_17 = arith.constant 0 : index
    %51 = vector.load %arg1[%c0_15, %c0_16, %c0_17] : memref<3x8x128xf32, #tpu.memory_space<vmem>>, vector<1x8x128xf32>
    %52 = vector.shape_cast %51 : vector<1x8x128xf32> to vector<8x128xf32>
    %53 = vector.broadcast %0 : f32 to vector<8x128xf32>
    %54 = arith.mulf %37, %53 : vector<8x128xf32>
    %55 = arith.addf %52, %54 : vector<8x128xf32>
    %56 = vector.broadcast %1 : f32 to vector<8x128xf32>
    %57 = arith.mulf %38, %56 : vector<8x128xf32>
    %58 = arith.addf %55, %57 : vector<8x128xf32>
    %59 = vector.broadcast %2 : f32 to vector<8x128xf32>
    %60 = arith.mulf %39, %59 : vector<8x128xf32>
    %61 = arith.addf %58, %60 : vector<8x128xf32>
    %62 = vector.broadcast %3 : f32 to vector<8x128xf32>
    %63 = arith.mulf %40, %62 : vector<8x128xf32>
    %64 = arith.addf %61, %63 : vector<8x128xf32>
    %65 = vector.broadcast %4 : f32 to vector<8x128xf32>
    %66 = arith.mulf %42, %65 : vector<8x128xf32>
    %67 = arith.addf %64, %66 : vector<8x128xf32>
    %68 = vector.broadcast %5 : f32 to vector<8x128xf32>
    %69 = arith.mulf %43, %68 : vector<8x128xf32>
    %70 = arith.addf %67, %69 : vector<8x128xf32>
    %71 = vector.broadcast %6 : f32 to vector<8x128xf32>
    %72 = arith.mulf %44, %71 : vector<8x128xf32>
    %73 = arith.addf %70, %72 : vector<8x128xf32>
    %74 = vector.broadcast %7 : f32 to vector<8x128xf32>
    %75 = arith.mulf %45, %74 : vector<8x128xf32>
    %76 = arith.addf %73, %75 : vector<8x128xf32>
    %77 = vector.broadcast %8 : f32 to vector<8x128xf32>
    %78 = arith.mulf %47, %77 : vector<8x128xf32>
    %79 = arith.addf %76, %78 : vector<8x128xf32>
    %80 = vector.broadcast %9 : f32 to vector<8x128xf32>
    %81 = arith.mulf %48, %80 : vector<8x128xf32>
    %82 = arith.addf %79, %81 : vector<8x128xf32>
    %83 = vector.broadcast %10 : f32 to vector<8x128xf32>
    %84 = arith.mulf %49, %83 : vector<8x128xf32>
    %85 = arith.addf %82, %84 : vector<8x128xf32>
    %86 = vector.broadcast %11 : f32 to vector<8x128xf32>
    %87 = arith.mulf %50, %86 : vector<8x128xf32>
    %88 = arith.addf %85, %87 : vector<8x128xf32>
    %c127_i32_18 = arith.constant 127 : i32
    %89 = tpu.dynamic_rotate %88 by %c127_i32_18 dim 1 : vector<8x128xf32>, i32 -> vector<8x128xf32>
    %90 = arith.maximumf %88, %89 : vector<8x128xf32>
    %c126_i32 = arith.constant 126 : i32
    %91 = tpu.dynamic_rotate %88 by %c126_i32 dim 1 : vector<8x128xf32>, i32 -> vector<8x128xf32>
    %92 = arith.maximumf %90, %91 : vector<8x128xf32>
    %c118_i32_19 = arith.constant 118 : i32
    %93 = tpu.dynamic_rotate %92 by %c118_i32_19 dim 1 : vector<8x128xf32>, i32 -> vector<8x128xf32>
    %94 = arith.maximumf %92, %93 : vector<8x128xf32>
    %c108_i32 = arith.constant 108 : i32
    %95 = tpu.dynamic_rotate %92 by %c108_i32 dim 1 : vector<8x128xf32>, i32 -> vector<8x128xf32>
    %96 = arith.maximumf %94, %95 : vector<8x128xf32>
    %c0_20 = arith.constant 0 : index
    %c0_21 = arith.constant 0 : index
    %c0_22 = arith.constant 0 : index
    %97 = vector.load %arg3[%c0_20, %c0_21, %c0_22] : memref<3x8x128xf32, #tpu.memory_space<vmem>>, vector<1x8x128xf32>
    %98 = vector.shape_cast %97 : vector<1x8x128xf32> to vector<8x128xf32>
    %99 = vector.shape_cast %96 : vector<8x128xf32> to vector<1x8x128xf32>
    tpu.vector_store %arg3[%c0_20, %c0_21, %c0_22], %99 {strides = array<i32>} : memref<3x8x128xf32, #tpu.memory_space<vmem>>, vector<1x8x128xf32>,
    %c1_23 = arith.constant 1 : index
    %c0_24 = arith.constant 0 : index
    %c0_25 = arith.constant 0 : index
    %100 = vector.load %arg1[%c1_23, %c0_24, %c0_25] : memref<3x8x128xf32, #tpu.memory_space<vmem>>, vector<1x8x128xf32>
    %101 = vector.shape_cast %100 : vector<1x8x128xf32> to vector<8x128xf32>
    %102 = vector.broadcast %12 : f32 to vector<8x128xf32>
    %103 = arith.mulf %37, %102 : vector<8x128xf32>
    %104 = arith.addf %101, %103 : vector<8x128xf32>
    %105 = vector.broadcast %13 : f32 to vector<8x128xf32>
    %106 = arith.mulf %38, %105 : vector<8x128xf32>
    %107 = arith.addf %104, %106 : vector<8x128xf32>
    %108 = vector.broadcast %14 : f32 to vector<8x128xf32>
    %109 = arith.mulf %39, %108 : vector<8x128xf32>
    %110 = arith.addf %107, %109 : vector<8x128xf32>
    %111 = vector.broadcast %15 : f32 to vector<8x128xf32>
    %112 = arith.mulf %40, %111 : vector<8x128xf32>
    %113 = arith.addf %110, %112 : vector<8x128xf32>
    %114 = vector.broadcast %16 : f32 to vector<8x128xf32>
    %115 = arith.mulf %42, %114 : vector<8x128xf32>
    %116 = arith.addf %113, %115 : vector<8x128xf32>
    %117 = vector.broadcast %17 : f32 to vector<8x128xf32>
    %118 = arith.mulf %43, %117 : vector<8x128xf32>
    %119 = arith.addf %116, %118 : vector<8x128xf32>
    %120 = vector.broadcast %18 : f32 to vector<8x128xf32>
    %121 = arith.mulf %44, %120 : vector<8x128xf32>
    %122 = arith.addf %119, %121 : vector<8x128xf32>
    %123 = vector.broadcast %19 : f32 to vector<8x128xf32>
    %124 = arith.mulf %45, %123 : vector<8x128xf32>
    %125 = arith.addf %122, %124 : vector<8x128xf32>
    %126 = vector.broadcast %20 : f32 to vector<8x128xf32>
    %127 = arith.mulf %47, %126 : vector<8x128xf32>
    %128 = arith.addf %125, %127 : vector<8x128xf32>
    %129 = vector.broadcast %21 : f32 to vector<8x128xf32>
    %130 = arith.mulf %48, %129 : vector<8x128xf32>
    %131 = arith.addf %128, %130 : vector<8x128xf32>
    %132 = vector.broadcast %22 : f32 to vector<8x128xf32>
    %133 = arith.mulf %49, %132 : vector<8x128xf32>
    %134 = arith.addf %131, %133 : vector<8x128xf32>
    %135 = vector.broadcast %23 : f32 to vector<8x128xf32>
    %136 = arith.mulf %50, %135 : vector<8x128xf32>
    %137 = arith.addf %134, %136 : vector<8x128xf32>
    %c127_i32_26 = arith.constant 127 : i32
    %138 = tpu.dynamic_rotate %137 by %c127_i32_26 dim 1 : vector<8x128xf32>, i32 -> vector<8x128xf32>
    %139 = arith.maximumf %137, %138 : vector<8x128xf32>
    %c126_i32_27 = arith.constant 126 : i32
    %140 = tpu.dynamic_rotate %137 by %c126_i32_27 dim 1 : vector<8x128xf32>, i32 -> vector<8x128xf32>
    %141 = arith.maximumf %139, %140 : vector<8x128xf32>
    %c118_i32_28 = arith.constant 118 : i32
    %142 = tpu.dynamic_rotate %141 by %c118_i32_28 dim 1 : vector<8x128xf32>, i32 -> vector<8x128xf32>
    %143 = arith.maximumf %141, %142 : vector<8x128xf32>
    %c108_i32_29 = arith.constant 108 : i32
    %144 = tpu.dynamic_rotate %141 by %c108_i32_29 dim 1 : vector<8x128xf32>, i32 -> vector<8x128xf32>
    %145 = arith.maximumf %143, %144 : vector<8x128xf32>
    %c1_30 = arith.constant 1 : index
    %c0_31 = arith.constant 0 : index
    %c0_32 = arith.constant 0 : index
    %146 = vector.load %arg3[%c1_30, %c0_31, %c0_32] : memref<3x8x128xf32, #tpu.memory_space<vmem>>, vector<1x8x128xf32>
    %147 = vector.shape_cast %146 : vector<1x8x128xf32> to vector<8x128xf32>
    %148 = vector.shape_cast %145 : vector<8x128xf32> to vector<1x8x128xf32>
    tpu.vector_store %arg3[%c1_30, %c0_31, %c0_32], %148 {strides = array<i32>} : memref<3x8x128xf32, #tpu.memory_space<vmem>>, vector<1x8x128xf32>,
    %c2_33 = arith.constant 2 : index
    %c0_34 = arith.constant 0 : index
    %c0_35 = arith.constant 0 : index
    %149 = vector.load %arg1[%c2_33, %c0_34, %c0_35] : memref<3x8x128xf32, #tpu.memory_space<vmem>>, vector<1x8x128xf32>
    %150 = vector.shape_cast %149 : vector<1x8x128xf32> to vector<8x128xf32>
    %151 = vector.broadcast %24 : f32 to vector<8x128xf32>
    %152 = arith.mulf %37, %151 : vector<8x128xf32>
    %153 = arith.addf %150, %152 : vector<8x128xf32>
    %154 = vector.broadcast %25 : f32 to vector<8x128xf32>
    %155 = arith.mulf %38, %154 : vector<8x128xf32>
    %156 = arith.addf %153, %155 : vector<8x128xf32>
    %157 = vector.broadcast %26 : f32 to vector<8x128xf32>
    %158 = arith.mulf %39, %157 : vector<8x128xf32>
    %159 = arith.addf %156, %158 : vector<8x128xf32>
    %160 = vector.broadcast %27 : f32 to vector<8x128xf32>
    %161 = arith.mulf %40, %160 : vector<8x128xf32>
    %162 = arith.addf %159, %161 : vector<8x128xf32>
    %163 = vector.broadcast %28 : f32 to vector<8x128xf32>
    %164 = arith.mulf %42, %163 : vector<8x128xf32>
    %165 = arith.addf %162, %164 : vector<8x128xf32>
    %166 = vector.broadcast %29 : f32 to vector<8x128xf32>
    %167 = arith.mulf %43, %166 : vector<8x128xf32>
    %168 = arith.addf %165, %167 : vector<8x128xf32>
    %169 = vector.broadcast %30 : f32 to vector<8x128xf32>
    %170 = arith.mulf %44, %169 : vector<8x128xf32>
    %171 = arith.addf %168, %170 : vector<8x128xf32>
    %172 = vector.broadcast %31 : f32 to vector<8x128xf32>
    %173 = arith.mulf %45, %172 : vector<8x128xf32>
    %174 = arith.addf %171, %173 : vector<8x128xf32>
    %175 = vector.broadcast %32 : f32 to vector<8x128xf32>
    %176 = arith.mulf %47, %175 : vector<8x128xf32>
    %177 = arith.addf %174, %176 : vector<8x128xf32>
    %178 = vector.broadcast %33 : f32 to vector<8x128xf32>
    %179 = arith.mulf %48, %178 : vector<8x128xf32>
    %180 = arith.addf %177, %179 : vector<8x128xf32>
    %181 = vector.broadcast %34 : f32 to vector<8x128xf32>
    %182 = arith.mulf %49, %181 : vector<8x128xf32>
    %183 = arith.addf %180, %182 : vector<8x128xf32>
    %184 = vector.broadcast %35 : f32 to vector<8x128xf32>
    %185 = arith.mulf %50, %184 : vector<8x128xf32>
    %186 = arith.addf %183, %185 : vector<8x128xf32>
    %c127_i32_36 = arith.constant 127 : i32
    %187 = tpu.dynamic_rotate %186 by %c127_i32_36 dim 1 : vector<8x128xf32>, i32 -> vector<8x128xf32>
    %188 = arith.maximumf %186, %187 : vector<8x128xf32>
    %c126_i32_37 = arith.constant 126 : i32
    %189 = tpu.dynamic_rotate %186 by %c126_i32_37 dim 1 : vector<8x128xf32>, i32 -> vector<8x128xf32>
    %190 = arith.maximumf %188, %189 : vector<8x128xf32>
    %c118_i32_38 = arith.constant 118 : i32
    %191 = tpu.dynamic_rotate %190 by %c118_i32_38 dim 1 : vector<8x128xf32>, i32 -> vector<8x128xf32>
    %192 = arith.maximumf %190, %191 : vector<8x128xf32>
    %c108_i32_39 = arith.constant 108 : i32
    %193 = tpu.dynamic_rotate %190 by %c108_i32_39 dim 1 : vector<8x128xf32>, i32 -> vector<8x128xf32>
    %194 = arith.maximumf %192, %193 : vector<8x128xf32>
    %c2_40 = arith.constant 2 : index
    %c0_41 = arith.constant 0 : index
    %c0_42 = arith.constant 0 : index
    %195 = vector.load %arg3[%c2_40, %c0_41, %c0_42] : memref<3x8x128xf32, #tpu.memory_space<vmem>>, vector<1x8x128xf32>
    %196 = vector.shape_cast %195 : vector<1x8x128xf32> to vector<8x128xf32>
    %197 = vector.shape_cast %194 : vector<8x128xf32> to vector<1x8x128xf32>
    tpu.vector_store %arg3[%c2_40, %c0_41, %c0_42], %197 {strides = array<i32>} : memref<3x8x128xf32, #tpu.memory_space<vmem>>, vector<1x8x128xf32>,
    return
  }
}

</mosaic_0001>

<llo_original>
// kernel: model_forward.1
$region0: #{model_forward.1}
  #allocation0 [shape = 'u32[]', space=smem, size = 0x4, offset = 0x4, fixed_abs, tag = 'smem constant byte address 0x4 - core index']
  #allocation1 [shape = 'u32[72,128]{1,0:T(1,128)}', space=vmem, size = 0x9000, scoped, tag = 'internal scratch']
  %s0 = inlined_call_operand.vmem [shape: f32[36], index: 0, kind: input, shape index: {}]
  %s1 = inlined_call_operand.vmem [shape: f32[3,8,128], index: 1, kind: input, shape index: {}]
  %s2 = inlined_call_operand.vmem [shape: f32[3,8,128], index: 2, kind: input, shape index: {}]
  %s3 = inlined_call_operand.vmem [shape: f32[3,8,128], index: 3, kind: output, shape index: {}]
  %s4 = sld [smem:[#allocation0]]
  $region26: #{model_forward.1} parent=0
    _
  %s6 = ssub.s32 1, %s4
  %s7 = scalar_select 0, %s6, %s4
  $region1: #{model_forward.1} parent=0
    #allocation2 [shape = 'u8[512]{0}', space=smem, size = 0x200, scoped, tag = 'input window, operand 0, single buffered']
    #allocation3 [shape = 's32[1]{0}', space=sflag, size = 0x4, scoped, tag = 'scoped memory for model_forward.1']
    %8 = vsyncpa [#allocation3], 0
    // Predicated region
    $region2: #{model_forward.1} parent=1 // pred_check
      _
    $region3: #{model_forward.1} parent=1 // pred_check_branch
      %10 = sbr.rel (0) target = $region5
    $region4: #{model_forward.1} parent=1 // pred_region
      %12 = vsyncadd [#allocation3], 0
      %s14 = sshll.u32 %s0, 4
      %s15 = int_to_ptr.vmem [resolvable:$true] %s14
      %17 = dma.vmem_to_smem %s15, 16, [#allocation2], [#allocation3]
    $region5: #{model_forward.1} parent=1 // pred_fallthru
      _
    // Predicated region
    $region6: #{model_forward.1} parent=1 // pred_check
      _
    $region7: #{model_forward.1} parent=1 // pred_check_branch
      %19 = sbr.rel (0) target = $region9
    $region8: #{model_forward.1} parent=1 // pred_region
      _
    $region9: #{model_forward.1} parent=1 // pred_fallthru
      _
    // Predicated region
    $region10: #{model_forward.1} parent=1 // pred_check
      _
    $region11: #{model_forward.1} parent=1 // pred_check_branch
      %21 = sbr.rel (0) target = $region13
    $region12: #{model_forward.1} parent=1 // pred_region
      _
    $region13: #{model_forward.1} parent=1 // pred_fallthru
      _
    // Predicated region
    $region14: #{model_forward.1} parent=1 // pred_check
      _
    $region15: #{model_forward.1} parent=1 // pred_check_branch
      %23 = sbr.rel (0) target = $region17
    $region16: #{model_forward.1} parent=1 // pred_region
      %25 = dma.done [#allocation3], 16
    $region17: #{model_forward.1} parent=1 // pred_fallthru
      _
    %26 = sfence
    %s27 = sld [smem:[#allocation2]]
    %s28 = sld [smem:[#allocation2 + $0x1]]
    %s29 = sld [smem:[#allocation2 + $0x2]]
    %s30 = sld [smem:[#allocation2 + $0x3]]
    %s31 = sld [smem:[#allocation2 + $0x4]]
    %s32 = sld [smem:[#allocation2 + $0x5]]
    %s33 = sld [smem:[#allocation2 + $0x6]]
    %s34 = sld [smem:[#allocation2 + $0x7]]
    %s35 = sld [smem:[#allocation2 + $0x8]]
    %s36 = sld [smem:[#allocation2 + $0x9]]
    %s37 = sld [smem:[#allocation2 + $0xa]]
    %s38 = sld [smem:[#allocation2 + $0xb]]
    %s39 = sld [smem:[#allocation2 + $0xc]]
    %s40 = sld [smem:[#allocation2 + $0xd]]
    %s41 = sld [smem:[#allocation2 + $0xe]]
    %s42 = sld [smem:[#allocation2 + $0xf]]
    %s43 = sld [smem:[#allocation2 + $0x10]]
    %s44 = sld [smem:[#allocation2 + $0x11]]
    %s45 = sld [smem:[#allocation2 + $0x12]]
    %s46 = sld [smem:[#allocation2 + $0x13]]
    %s47 = sld [smem:[#allocation2 + $0x14]]
    %s48 = sld [smem:[#allocation2 + $0x15]]
    %s49 = sld [smem:[#allocation2 + $0x16]]
    %s50 = sld [smem:[#allocation2 + $0x17]]
    %s51 = sld [smem:[#allocation2 + $0x18]]
    %s52 = sld [smem:[#allocation2 + $0x19]]
    %s53 = sld [smem:[#allocation2 + $0x1a]]
    %s54 = sld [smem:[#allocation2 + $0x1b]]
    %s55 = sld [smem:[#allocation2 + $0x1c]]
    %s56 = sld [smem:[#allocation2 + $0x1d]]
    %s57 = sld [smem:[#allocation2 + $0x1e]]
    %s58 = sld [smem:[#allocation2 + $0x1f]]
    %s59 = sld [smem:[#allocation2 + $0x20]]
    %s60 = sld [smem:[#allocation2 + $0x21]]
    %s61 = sld [smem:[#allocation2 + $0x22]]
    %s62 = sld [smem:[#allocation2 + $0x23]]
    %v63 = vld [vmem:[%s2] sm:$0xff]
    %64 = vrot.lane.b32.xlu0 %v63, 127
    %v65 = vpop.permute.xlu0 %64
    %66 = vrot.lane.b32.xlu0 %v63, 118
    %v67 = vpop.permute.xlu0 %66
    %68 = vrot.lane.b32.xlu0 %v63, 117
    %v69 = vpop.permute.xlu0 %68
    %s70 = scalar_lea.vmem %s2, 8
    %v71 = vld [vmem:[%s70] sm:$0xff]
    %72 = vrot.lane.b32.xlu0 %v71, 127
    %v73 = vpop.permute.xlu0 %72
    %74 = vrot.lane.b32.xlu0 %v71, 118
    %v75 = vpop.permute.xlu0 %74
    %76 = vrot.lane.b32.xlu0 %v71, 117
    %v77 = vpop.permute.xlu0 %76
    %s78 = scalar_lea.vmem %s2, 16
    %v79 = vld [vmem:[%s78] sm:$0xff]
    %80 = vrot.lane.b32.xlu0 %v79, 127
    %v81 = vpop.permute.xlu0 %80
    %82 = vrot.lane.b32.xlu0 %v79, 118
    %v83 = vpop.permute.xlu0 %82
    %84 = vrot.lane.b32.xlu0 %v79, 117
    %v85 = vpop.permute.xlu0 %84
    %v86 = vld [vmem:[%s1] sm:$0xff]
    %v87 = vstv %s27
    %v88 = vmul.f32 %v63, %v87
    %v89 = vadd.f32 %v86, %v88
    %v90 = vstv %s28
    %v91 = vmul.f32 %v65, %v90
    %v92 = vadd.f32 %v89, %v91
    %v93 = vstv %s29
    %v94 = vmul.f32 %v67, %v93
    %v95 = vadd.f32 %v92, %v94
    %v96 = vstv %s30
    %v97 = vmul.f32 %v69, %v96
    %v98 = vadd.f32 %v95, %v97
    %v99 = vstv %s31
    %v100 = vmul.f32 %v71, %v99
    %v101 = vadd.f32 %v98, %v100
    %v102 = vstv %s32
    %v103 = vmul.f32 %v73, %v102
    %v104 = vadd.f32 %v101, %v103
    %v105 = vstv %s33
    %v106 = vmul.f32 %v75, %v105
    %v107 = vadd.f32 %v104, %v106
    %v108 = vstv %s34
    %v109 = vmul.f32 %v77, %v108
    %v110 = vadd.f32 %v107, %v109
    %v111 = vstv %s35
    %v112 = vmul.f32 %v79, %v111
    %v113 = vadd.f32 %v110, %v112
    %v114 = vstv %s36
    %v115 = vmul.f32 %v81, %v114
    %v116 = vadd.f32 %v113, %v115
    %v117 = vstv %s37
    %v118 = vmul.f32 %v83, %v117
    %v119 = vadd.f32 %v116, %v118
    %v120 = vstv %s38
    %v121 = vmul.f32 %v85, %v120
    %v122 = vadd.f32 %v119, %v121
    %123 = vrot.lane.b32.xlu0 %v122, 127
    %v124 = vpop.permute.xlu0 %123
    %v125 = vmax.f32 %v122, %v124
    %126 = vrot.lane.b32.xlu0 %v122, 126
    %v127 = vpop.permute.xlu0 %126
    %v128 = vmax.f32 %v125, %v127
    %129 = vrot.lane.b32.xlu0 %v128, 118
    %v130 = vpop.permute.xlu0 %129
    %v131 = vmax.f32 %v128, %v130
    %132 = vrot.lane.b32.xlu0 %v128, 108
    %v133 = vpop.permute.xlu0 %132
    %v134 = vmax.f32 %v131, %v133
    %135 = vst [vmem:[%s3] sm:$0xff] %v134
    %s136 = scalar_lea.vmem %s1, 8
    %v137 = vld [vmem:[%s136] sm:$0xff]
    %v138 = vstv %s39
    %v139 = vmul.f32 %v63, %v138
    %v140 = vadd.f32 %v137, %v139
    %v141 = vstv %s40
    %v142 = vmul.f32 %v65, %v141
    %v143 = vadd.f32 %v140, %v142
    %v144 = vstv %s41
    %v145 = vmul.f32 %v67, %v144
    %v146 = vadd.f32 %v143, %v145
    %v147 = vstv %s42
    %v148 = vmul.f32 %v69, %v147
    %v149 = vadd.f32 %v146, %v148
    %v150 = vstv %s43
    %v151 = vmul.f32 %v71, %v150
    %v152 = vadd.f32 %v149, %v151
    %v153 = vstv %s44
    %v154 = vmul.f32 %v73, %v153
    %v155 = vadd.f32 %v152, %v154
    %v156 = vstv %s45
    %v157 = vmul.f32 %v75, %v156
    %v158 = vadd.f32 %v155, %v157
    %v159 = vstv %s46
    %v160 = vmul.f32 %v77, %v159
    %v161 = vadd.f32 %v158, %v160
    %v162 = vstv %s47
    %v163 = vmul.f32 %v79, %v162
    %v164 = vadd.f32 %v161, %v163
    %v165 = vstv %s48
    %v166 = vmul.f32 %v81, %v165
    %v167 = vadd.f32 %v164, %v166
    %v168 = vstv %s49
    %v169 = vmul.f32 %v83, %v168
    %v170 = vadd.f32 %v167, %v169
    %v171 = vstv %s50
    %v172 = vmul.f32 %v85, %v171
    %v173 = vadd.f32 %v170, %v172
    %174 = vrot.lane.b32.xlu0 %v173, 127
    %v175 = vpop.permute.xlu0 %174
    %v176 = vmax.f32 %v173, %v175
    %177 = vrot.lane.b32.xlu0 %v173, 126
    %v178 = vpop.permute.xlu0 %177
    %v179 = vmax.f32 %v176, %v178
    %180 = vrot.lane.b32.xlu0 %v179, 118
    %v181 = vpop.permute.xlu0 %180
    %v182 = vmax.f32 %v179, %v181
    %183 = vrot.lane.b32.xlu0 %v179, 108
    %v184 = vpop.permute.xlu0 %183
    %v185 = vmax.f32 %v182, %v184
    %s186 = scalar_lea.vmem %s3, 8
    %187 = vst [vmem:[%s186] sm:$0xff] %v185
    %s188 = scalar_lea.vmem %s1, 16
    %v189 = vld [vmem:[%s188] sm:$0xff]
    %v190 = vstv %s51
    %v191 = vmul.f32 %v63, %v190
    %v192 = vadd.f32 %v189, %v191
    %v193 = vstv %s52
    %v194 = vmul.f32 %v65, %v193
    %v195 = vadd.f32 %v192, %v194
    %v196 = vstv %s53
    %v197 = vmul.f32 %v67, %v196
    %v198 = vadd.f32 %v195, %v197
    %v199 = vstv %s54
    %v200 = vmul.f32 %v69, %v199
    %v201 = vadd.f32 %v198, %v200
    %v202 = vstv %s55
    %v203 = vmul.f32 %v71, %v202
    %v204 = vadd.f32 %v201, %v203
    %v205 = vstv %s56
    %v206 = vmul.f32 %v73, %v205
    %v207 = vadd.f32 %v204, %v206
    %v208 = vstv %s57
    %v209 = vmul.f32 %v75, %v208
    %v210 = vadd.f32 %v207, %v209
    %v211 = vstv %s58
    %v212 = vmul.f32 %v77, %v211
    %v213 = vadd.f32 %v210, %v212
    %v214 = vstv %s59
    %v215 = vmul.f32 %v79, %v214
    %v216 = vadd.f32 %v213, %v215
    %v217 = vstv %s60
    %v218 = vmul.f32 %v81, %v217
    %v219 = vadd.f32 %v216, %v218
    %v220 = vstv %s61
    %v221 = vmul.f32 %v83, %v220
    %v222 = vadd.f32 %v219, %v221
    %v223 = vstv %s62
    %v224 = vmul.f32 %v85, %v223
    %v225 = vadd.f32 %v222, %v224
    %226 = vrot.lane.b32.xlu0 %v225, 127
    %v227 = vpop.permute.xlu0 %226
    %v228 = vmax.f32 %v225, %v227
    %229 = vrot.lane.b32.xlu0 %v225, 126
    %v230 = vpop.permute.xlu0 %229
    %v231 = vmax.f32 %v228, %v230
    %232 = vrot.lane.b32.xlu0 %v231, 118
    %v233 = vpop.permute.xlu0 %232
    %v234 = vmax.f32 %v231, %v233
    %235 = vrot.lane.b32.xlu0 %v231, 108
    %v236 = vpop.permute.xlu0 %235
    %v237 = vmax.f32 %v234, %v236
    %s238 = scalar_lea.vmem %s3, 16
    %239 = vst [vmem:[%s238] sm:$0xff] %v237
    // Predicated region
    $region18: #{model_forward.1} parent=1 // pred_check
      _
    $region19: #{model_forward.1} parent=1 // pred_check_branch
      %241 = sbr.rel (0) target = $region21
    $region20: #{model_forward.1} parent=1 // pred_region
      _
    $region21: #{model_forward.1} parent=1 // pred_fallthru
      _
    // Predicated region
    $region22: #{model_forward.1} parent=1 // pred_check
      _
    $region23: #{model_forward.1} parent=1 // pred_check_branch
      %243 = sbr.rel (0) target = $region25
    $region24: #{model_forward.1} parent=1 // pred_region
      _
    $region25: #{model_forward.1} parent=1 // pred_fallthru
      _
    %244 = vsyncpa [#allocation3], 1

</llo_original>
